<compile_context>
chip_gen: v7x
topology: tpu7x:2x2x1
jax: 0.10.0
libtpu: 0.0.40
codegen_flags: <defaults>
</compile_context>

<pallas_src>
import functools

import jax
import jax.numpy as jnp
from jax.experimental import pallas as pl
from jax.experimental.pallas import tpu as pltpu


# --------------------------------------------------------------------------
# Kernel
# --------------------------------------------------------------------------

def _layer(v_bf16, w_ref, b_ref, act_dtype):
    """Linear + SiLU. bf16 MXU inputs, f32 accumulation, activation in
    `act_dtype` (bf16 on v6e/v7x, f32 on v5e). Returns bf16 for the next
    matmul."""
    y = jnp.dot(v_bf16, w_ref[...], preferred_element_type=jnp.float32)
    y = y.astype(act_dtype) + b_ref[...].astype(act_dtype)
    # SiLU(y) = y * sigmoid(y) = 0.5 * y * (tanh(0.5*y) + 1): one EUP push.
    y = 0.5 * y * (jnp.tanh(0.5 * y) + 1.0)
    return y.astype(jnp.bfloat16)


def dann_kernel(
    x_ref,
    # feature extractor (weights bf16, biases f32)
    w1_ref, b1_ref, w2_ref, b2_ref, w3_ref, b3_ref,
    # fused class+domain heads (block-diagonal for layers 2/3)
    wh1_ref, bh1_ref, wh2_ref, bh2_ref, wh3_ref, bh3_ref,
    # fused output slab: lanes 0-1 = label, lanes 2-5 = domain, 6-7 padding
    out_ref,
    *, act_dtype,
):
    # In-kernel cast: f32 x is streamed from HBM once; VPU cast is free.
    x = x_ref[...].astype(jnp.bfloat16)                      # (TB, D)

    # feature: fc1 -> SiLU -> fc2 -> SiLU -> fc3 -> SiLU
    h = _layer(x, w1_ref, b1_ref, act_dtype)                 # (TB, 128)
    h = _layer(h, w2_ref, b2_ref, act_dtype)                 # (TB, 64)
    feat = _layer(h, w3_ref, b3_ref, act_dtype)              # (TB, 32)

    # GradientReversal is identity in the forward pass: both heads read feat.
    g = _layer(feat, wh1_ref, bh1_ref, act_dtype)            # (TB, 32)
    g = _layer(g, wh2_ref, bh2_ref, act_dtype)               # (TB, 16)

    # Final fused head layer: no activation, bias add kept in f32.
    y = jnp.dot(g, wh3_ref[...], preferred_element_type=jnp.float32)
    y = y + bh3_ref[...]                                     # (TB, 8) f32
    out_ref[...] = y.astype(out_ref.dtype)


# --------------------------------------------------------------------------
# Parameters
# --------------------------------------------------------------------------

def init_params(key, input_dim):
    """Deterministic, PyTorch-Linear-like init. Weights are (in, out)."""
    dims = {
        "fc1": (input_dim, 128), "fc2": (128, 64), "fc3": (64, 32),
        "c_fc1": (32, 16), "c_fc2": (16, 8), "c_fc3": (8, 2),
        "d_fc1": (32, 16), "d_fc2": (16, 8), "d_fc3": (8, 4),
    }
    params = {}
    for name, (fan_in, fan_out) in dims.items():
        key, kw, kb = jax.random.split(key, 3)
        bound = 1.0 / (fan_in ** 0.5)
        w = jax.random.uniform(kw, (fan_in, fan_out), jnp.float32, -bound, bound)
        b = jax.random.uniform(kb, (1, fan_out), jnp.float32, -bound, bound)
        params[name] = (w, b)
    return params


def _fuse_heads(params):
    """Fuse the class & domain heads into 3 wider (block-diagonal) layers."""
    wc1, bc1 = params["c_fc1"]; wd1, bd1 = params["d_fc1"]
    wc2, bc2 = params["c_fc2"]; wd2, bd2 = params["d_fc2"]
    wc3, bc3 = params["c_fc3"]; wd3, bd3 = params["d_fc3"]

    wh1 = jnp.concatenate([wc1, wd1], axis=1)            # (32, 32)
    bh1 = jnp.concatenate([bc1, bd1], axis=1)            # (1, 32)

    wh2 = jnp.zeros((32, 16), jnp.float32)               # block-diagonal
    wh2 = wh2.at[:16, :8].set(wc2).at[16:, 8:].set(wd2)
    bh2 = jnp.concatenate([bc2, bd2], axis=1)            # (1, 16)

    wh3 = jnp.zeros((16, 8), jnp.float32)                # lanes 0-1 label,
    wh3 = wh3.at[:8, :2].set(wc3).at[8:, 2:6].set(wd3)   # lanes 2-5 domain
    bh3 = jnp.zeros((1, 8), jnp.float32)
    bh3 = bh3.at[:, :2].set(bc3).at[:, 2:6].set(bd3)

    return (wh1, bh1, wh2, bh2, wh3, bh3)


def prepare_params(params):
    """One-time packing: bf16 weights, f32 biases, fused block-diagonal heads.
    Call once and reuse — keeps the jitted forward to a single pallas_call."""
    flat = []
    for name in ("fc1", "fc2", "fc3"):
        w, b = params[name]
        flat.extend((w.astype(jnp.bfloat16), b.astype(jnp.float32)))
    fused = _fuse_heads(params)
    for i in range(0, len(fused), 2):
        flat.extend((fused[i].astype(jnp.bfloat16),
                     fused[i + 1].astype(jnp.float32)))
    return tuple(jax.device_put(a) for a in flat)


# --------------------------------------------------------------------------
# Chip-aware policy helpers (trace-time Python; safe fallbacks everywhere)
# --------------------------------------------------------------------------

def _round_up(n, m):
    return ((n + m - 1) // m) * m


def _num_tensorcores():
    try:
        return max(1, int(getattr(jax.devices()[0], "num_cores", 1)))
    except Exception:
        return 1


def _bf16_act_supported():
    """bf16 VPU/EUP exists on v6e/v7x; v5e keeps the f32 activation path."""
    try:
        kind = jax.devices()[0].device_kind.lower()
    except Exception:
        return True
    return not any(tag in kind for tag in ("v5 lite", "v5e", "v5lite"))


def _auto_batch_tile(batch, num_cores):
    if num_cores >= 2:
        # Exactly num_cores balanced steps so every TensorCore gets work.
        tile = _round_up(pl.cdiv(batch, num_cores), 16)
    else:
        # Single-TC chip: one big step when B fits (amortize ~0.35us/step).
        tile = _round_up(batch, 16)
    tile = min(tile, 2048)       # VMEM use at 2048 rows is still ~2.5 MiB
    return max(16, tile)         # 16-row floor: full bf16 sublane pack


# --------------------------------------------------------------------------
# Forward wrapper
# --------------------------------------------------------------------------

@functools.partial(jax.jit, static_argnames=("batch_tile", "bf16_act"))
def dann_forward(x, alpha, flat_params, *, batch_tile=None, bf16_act=None):
    """x: (B, input_dim) float32, flat_params from prepare_params().
    Returns (label (B, 2), domain (B, 4)) float32."""
    del alpha  # GradientReversal is identity in the forward pass
    B, D = x.shape

    if bf16_act is None:
        bf16_act = _bf16_act_supported()
    tile = batch_tile if batch_tile is not None else _auto_batch_tile(
        B, _num_tensorcores())
    grid = pl.cdiv(B, tile)      # ragged tail handled by the edge block

    def full_spec(p):
        # Tiny, grid-invariant parameter: whole array resident in VMEM.
        return pl.BlockSpec(p.shape, lambda i, n=p.ndim: (0,) * n)

    in_specs = [pl.BlockSpec((tile, D), lambda i: (i, 0))]
    in_specs += [full_spec(p) for p in flat_params]
    out_specs = pl.BlockSpec((tile, 8), lambda i: (i, 0))

    grid_spec = pltpu.PrefetchScalarGridSpec(
        num_scalar_prefetch=0,
        grid=(grid,),
        in_specs=in_specs,
        out_specs=out_specs,
    )

    kernel = functools.partial(
        dann_kernel,
        act_dtype=jnp.bfloat16 if bf16_act else jnp.float32,
    )

    out = pl.pallas_call(
        kernel,
        out_shape=jax.ShapeDtypeStruct((B, 8), jnp.float32),
        grid_spec=grid_spec,
        compiler_params=pltpu.CompilerParams(
            dimension_semantics=("parallel",),
        ),
    )(x, *flat_params)

    label = out[:, 0:2]
    domain = out[:, 2:6]
    return label, domain


# --------------------------------------------------------------------------
# Pure-JAX reference (PyTorch module semantics) for correctness
# --------------------------------------------------------------------------

def dann_forward_ref(x, alpha, params):
    del alpha

    def lin(v, name, act):
        w, b = params[name]
        y = v @ w + b
        return y * jax.nn.sigmoid(y) if act else y

    h = lin(x, "fc1", True)
    h = lin(h, "fc2", True)
    feat = lin(h, "fc3", True)
    c = lin(lin(lin(feat, "c_fc1", True), "c_fc2", True), "c_fc3", False)
    d = lin(lin(lin(feat, "d_fc1", True), "d_fc2", True), "d_fc3", False)
    return c, d


if __name__ == "__main__":
    key = jax.random.PRNGKey(0)
    k_x, k_x2, k_p = jax.random.split(key, 3)

    INPUT_DIM = 32
    params = init_params(k_p, INPUT_DIM)
    flat_params = prepare_params(params)      # one-time fuse + bf16 cast
    alpha = jnp.float32(0.5)

    # Small demo batch (single grid step, ragged vs. the 16-row tile floor).
    x_small = jax.random.normal(k_x, (8, INPUT_DIM), jnp.float32)
    label, domain = dann_forward(x_small, alpha, flat_params)
    jax.block_until_ready((label, domain))
    label_r, domain_r = dann_forward_ref(x_small, alpha, params)
    assert label.shape == (8, 2) and domain.shape == (8, 4)
    assert jnp.allclose(label, label_r, atol=5e-2, rtol=5e-2)
    assert jnp.allclose(domain, domain_r, atol=5e-2, rtol=5e-2)

    # Larger ragged batch: single big step on v5e/v6e, two balanced steps on
    # multi-TensorCore chips — no wrapper-side pad/cast either way.
    x_big = jax.random.normal(k_x2, (300, INPUT_DIM), jnp.float32)
    label2, domain2 = dann_forward(x_big, alpha, flat_params)
    jax.block_until_ready((label2, domain2))
    label2_r, domain2_r = dann_forward_ref(x_big, alpha, params)
    assert label2.shape == (300, 2) and domain2.shape == (300, 4)
    assert jnp.allclose(label2, label2_r, atol=5e-2, rtol=5e-2)
    assert jnp.allclose(domain2, domain2_r, atol=5e-2, rtol=5e-2)

    print("KERNEL_OK")
</pallas_src>

<mosaic_0001>
module attributes {stable_mosaic.version = 11 : i64} {
  func.func @dann_kernel(%arg0: i32, %arg1: memref<16x32xf32, #tpu.memory_space<vmem>>, %arg2: memref<32x128xbf16, #tpu.memory_space<vmem>>, %arg3: memref<1x128xf32, #tpu.memory_space<vmem>>, %arg4: memref<128x64xbf16, #tpu.memory_space<vmem>>, %arg5: memref<1x64xf32, #tpu.memory_space<vmem>>, %arg6: memref<64x32xbf16, #tpu.memory_space<vmem>>, %arg7: memref<1x32xf32, #tpu.memory_space<vmem>>, %arg8: memref<32x32xbf16, #tpu.memory_space<vmem>>, %arg9: memref<1x32xf32, #tpu.memory_space<vmem>>, %arg10: memref<32x16xbf16, #tpu.memory_space<vmem>>, %arg11: memref<1x16xf32, #tpu.memory_space<vmem>>, %arg12: memref<16x8xbf16, #tpu.memory_space<vmem>>, %arg13: memref<1x8xf32, #tpu.memory_space<vmem>>, %arg14: memref<16x8xf32, #tpu.memory_space<vmem>>) attributes {dimension_semantics = [#tpu.dimension_semantics<parallel>], iteration_bounds = array<i64: 1>, scalar_prefetch = 0 : i64, scratch_operands = 0 : i64, tpu.core_type = #tpu.core_type<tc>, window_params = [{transform_indices = @transform_0, window_bounds = array<i64: 16, 32>}, {pipeline_mode = #tpu.pipeline_mode<synchronous>, transform_indices = @transform_1, window_bounds = array<i64: 32, 128>}, {pipeline_mode = #tpu.pipeline_mode<synchronous>, transform_indices = @transform_2, window_bounds = array<i64: 1, 128>}, {pipeline_mode = #tpu.pipeline_mode<synchronous>, transform_indices = @transform_3, window_bounds = array<i64: 128, 64>}, {pipeline_mode = #tpu.pipeline_mode<synchronous>, transform_indices = @transform_4, window_bounds = array<i64: 1, 64>}, {pipeline_mode = #tpu.pipeline_mode<synchronous>, transform_indices = @transform_5, window_bounds = array<i64: 64, 32>}, {pipeline_mode = #tpu.pipeline_mode<synchronous>, transform_indices = @transform_6, window_bounds = array<i64: 1, 32>}, {pipeline_mode = #tpu.pipeline_mode<synchronous>, transform_indices = @transform_7, window_bounds = array<i64: 32, 32>}, {pipeline_mode = #tpu.pipeline_mode<synchronous>, transform_indices = @transform_8, window_bounds = array<i64: 1, 32>}, {pipeline_mode = #tpu.pipeline_mode<synchronous>, transform_indices = @transform_9, window_bounds = array<i64: 32, 16>}, {pipeline_mode = #tpu.pipeline_mode<synchronous>, transform_indices = @transform_10, window_bounds = array<i64: 1, 16>}, {pipeline_mode = #tpu.pipeline_mode<synchronous>, transform_indices = @transform_11, window_bounds = array<i64: 16, 8>}, {pipeline_mode = #tpu.pipeline_mode<synchronous>, transform_indices = @transform_12, window_bounds = array<i64: 1, 8>}, {transform_indices = @transform_13, window_bounds = array<i64: 16, 8>}]} {
    %c0 = arith.constant 0 : index
    %c0_0 = arith.constant 0 : index
    %0 = vector.load %arg1[%c0, %c0_0] : memref<16x32xf32, #tpu.memory_space<vmem>>, vector<16x32xf32>
    %1 = arith.truncf %0 : vector<16x32xf32> to vector<16x32xbf16>
    %c0_1 = arith.constant 0 : index
    %c0_2 = arith.constant 0 : index
    %2 = vector.load %arg2[%c0_1, %c0_2] : memref<32x128xbf16, #tpu.memory_space<vmem>>, vector<32x128xbf16>
    %cst = arith.constant dense<0.000000e+00> : vector<16x128xf32>
    %3 = tpu.matmul %1, %2, %cst {dimension_numbers = #tpu.dot_dimension_numbers<[1], [0], [0], [1], [0, 0, 1, 1], [], []>} : vector<16x32xbf16>, vector<32x128xbf16>, vector<16x128xf32> -> vector<16x128xf32>
    %4 = arith.truncf %3 : vector<16x128xf32> to vector<16x128xbf16>
    %c0_3 = arith.constant 0 : index
    %c0_4 = arith.constant 0 : index
    %5 = vector.load %arg3[%c0_3, %c0_4] : memref<1x128xf32, #tpu.memory_space<vmem>>, vector<1x128xf32>
    %6 = arith.truncf %5 : vector<1x128xf32> to vector<1x128xbf16>
    %7 = vector.broadcast %6 : vector<1x128xbf16> to vector<16x128xbf16>
    %8 = arith.addf %4, %7 : vector<16x128xbf16>
    %cst_5 = arith.constant 5.000000e-01 : bf16
    %9 = vector.broadcast %cst_5 : bf16 to vector<16x128xbf16>
    %10 = arith.mulf %9, %8 : vector<16x128xbf16>
    %cst_6 = arith.constant 5.000000e-01 : bf16
    %11 = vector.broadcast %cst_6 : bf16 to vector<16x128xbf16>
    %12 = arith.mulf %11, %8 : vector<16x128xbf16>
    %13 = math.tanh %12 : vector<16x128xbf16>
    %cst_7 = arith.constant 1.000000e+00 : bf16
    %14 = vector.broadcast %cst_7 : bf16 to vector<16x128xbf16>
    %15 = arith.addf %13, %14 : vector<16x128xbf16>
    %16 = arith.mulf %10, %15 : vector<16x128xbf16>
    %c0_8 = arith.constant 0 : index
    %c0_9 = arith.constant 0 : index
    %17 = vector.load %arg4[%c0_8, %c0_9] : memref<128x64xbf16, #tpu.memory_space<vmem>>, vector<128x64xbf16>
    %cst_10 = arith.constant dense<0.000000e+00> : vector<16x64xf32>
    %18 = tpu.matmul %16, %17, %cst_10 {dimension_numbers = #tpu.dot_dimension_numbers<[1], [0], [0], [1], [0, 0, 1, 1], [], []>} : vector<16x128xbf16>, vector<128x64xbf16>, vector<16x64xf32> -> vector<16x64xf32>
    %19 = arith.truncf %18 : vector<16x64xf32> to vector<16x64xbf16>
    %c0_11 = arith.constant 0 : index
    %c0_12 = arith.constant 0 : index
    %20 = vector.load %arg5[%c0_11, %c0_12] : memref<1x64xf32, #tpu.memory_space<vmem>>, vector<1x64xf32>
    %21 = arith.truncf %20 : vector<1x64xf32> to vector<1x64xbf16>
    %22 = vector.broadcast %21 : vector<1x64xbf16> to vector<16x64xbf16>
    %23 = arith.addf %19, %22 : vector<16x64xbf16>
    %cst_13 = arith.constant 5.000000e-01 : bf16
    %24 = vector.broadcast %cst_13 : bf16 to vector<16x64xbf16>
    %25 = arith.mulf %24, %23 : vector<16x64xbf16>
    %cst_14 = arith.constant 5.000000e-01 : bf16
    %26 = vector.broadcast %cst_14 : bf16 to vector<16x64xbf16>
    %27 = arith.mulf %26, %23 : vector<16x64xbf16>
    %28 = math.tanh %27 : vector<16x64xbf16>
    %cst_15 = arith.constant 1.000000e+00 : bf16
    %29 = vector.broadcast %cst_15 : bf16 to vector<16x64xbf16>
    %30 = arith.addf %28, %29 : vector<16x64xbf16>
    %31 = arith.mulf %25, %30 : vector<16x64xbf16>
    %c0_16 = arith.constant 0 : index
    %c0_17 = arith.constant 0 : index
    %32 = vector.load %arg6[%c0_16, %c0_17] : memref<64x32xbf16, #tpu.memory_space<vmem>>, vector<64x32xbf16>
    %cst_18 = arith.constant dense<0.000000e+00> : vector<16x32xf32>
    %33 = tpu.matmul %31, %32, %cst_18 {dimension_numbers = #tpu.dot_dimension_numbers<[1], [0], [0], [1], [0, 0, 1, 1], [], []>} : vector<16x64xbf16>, vector<64x32xbf16>, vector<16x32xf32> -> vector<16x32xf32>
    %34 = arith.truncf %33 : vector<16x32xf32> to vector<16x32xbf16>
    %c0_19 = arith.constant 0 : index
    %c0_20 = arith.constant 0 : index
    %35 = vector.load %arg7[%c0_19, %c0_20] : memref<1x32xf32, #tpu.memory_space<vmem>>, vector<1x32xf32>
    %36 = arith.truncf %35 : vector<1x32xf32> to vector<1x32xbf16>
    %37 = vector.broadcast %36 : vector<1x32xbf16> to vector<16x32xbf16>
    %38 = arith.addf %34, %37 : vector<16x32xbf16>
    %cst_21 = arith.constant 5.000000e-01 : bf16
    %39 = vector.broadcast %cst_21 : bf16 to vector<16x32xbf16>
    %40 = arith.mulf %39, %38 : vector<16x32xbf16>
    %cst_22 = arith.constant 5.000000e-01 : bf16
    %41 = vector.broadcast %cst_22 : bf16 to vector<16x32xbf16>
    %42 = arith.mulf %41, %38 : vector<16x32xbf16>
    %43 = math.tanh %42 : vector<16x32xbf16>
    %cst_23 = arith.constant 1.000000e+00 : bf16
    %44 = vector.broadcast %cst_23 : bf16 to vector<16x32xbf16>
    %45 = arith.addf %43, %44 : vector<16x32xbf16>
    %46 = arith.mulf %40, %45 : vector<16x32xbf16>
    %c0_24 = arith.constant 0 : index
    %c0_25 = arith.constant 0 : index
    %47 = vector.load %arg8[%c0_24, %c0_25] : memref<32x32xbf16, #tpu.memory_space<vmem>>, vector<32x32xbf16>
    %cst_26 = arith.constant dense<0.000000e+00> : vector<16x32xf32>
    %48 = tpu.matmul %46, %47, %cst_26 {dimension_numbers = #tpu.dot_dimension_numbers<[1], [0], [0], [1], [0, 0, 1, 1], [], []>} : vector<16x32xbf16>, vector<32x32xbf16>, vector<16x32xf32> -> vector<16x32xf32>
    %49 = arith.truncf %48 : vector<16x32xf32> to vector<16x32xbf16>
    %c0_27 = arith.constant 0 : index
    %c0_28 = arith.constant 0 : index
    %50 = vector.load %arg9[%c0_27, %c0_28] : memref<1x32xf32, #tpu.memory_space<vmem>>, vector<1x32xf32>
    %51 = arith.truncf %50 : vector<1x32xf32> to vector<1x32xbf16>
    %52 = vector.broadcast %51 : vector<1x32xbf16> to vector<16x32xbf16>
    %53 = arith.addf %49, %52 : vector<16x32xbf16>
    %cst_29 = arith.constant 5.000000e-01 : bf16
    %54 = vector.broadcast %cst_29 : bf16 to vector<16x32xbf16>
    %55 = arith.mulf %54, %53 : vector<16x32xbf16>
    %cst_30 = arith.constant 5.000000e-01 : bf16
    %56 = vector.broadcast %cst_30 : bf16 to vector<16x32xbf16>
    %57 = arith.mulf %56, %53 : vector<16x32xbf16>
    %58 = math.tanh %57 : vector<16x32xbf16>
    %cst_31 = arith.constant 1.000000e+00 : bf16
    %59 = vector.broadcast %cst_31 : bf16 to vector<16x32xbf16>
    %60 = arith.addf %58, %59 : vector<16x32xbf16>
    %61 = arith.mulf %55, %60 : vector<16x32xbf16>
    %c0_32 = arith.constant 0 : index
    %c0_33 = arith.constant 0 : index
    %62 = vector.load %arg10[%c0_32, %c0_33] : memref<32x16xbf16, #tpu.memory_space<vmem>>, vector<32x16xbf16>
    %cst_34 = arith.constant dense<0.000000e+00> : vector<16x16xf32>
    %63 = tpu.matmul %61, %62, %cst_34 {dimension_numbers = #tpu.dot_dimension_numbers<[1], [0], [0], [1], [0, 0, 1, 1], [], []>} : vector<16x32xbf16>, vector<32x16xbf16>, vector<16x16xf32> -> vector<16x16xf32>
    %64 = arith.truncf %63 : vector<16x16xf32> to vector<16x16xbf16>
    %c0_35 = arith.constant 0 : index
    %c0_36 = arith.constant 0 : index
    %65 = vector.load %arg11[%c0_35, %c0_36] : memref<1x16xf32, #tpu.memory_space<vmem>>, vector<1x16xf32>
    %66 = arith.truncf %65 : vector<1x16xf32> to vector<1x16xbf16>
    %67 = vector.broadcast %66 : vector<1x16xbf16> to vector<16x16xbf16>
    %68 = arith.addf %64, %67 : vector<16x16xbf16>
    %cst_37 = arith.constant 5.000000e-01 : bf16
    %69 = vector.broadcast %cst_37 : bf16 to vector<16x16xbf16>
    %70 = arith.mulf %69, %68 : vector<16x16xbf16>
    %cst_38 = arith.constant 5.000000e-01 : bf16
    %71 = vector.broadcast %cst_38 : bf16 to vector<16x16xbf16>
    %72 = arith.mulf %71, %68 : vector<16x16xbf16>
    %73 = math.tanh %72 : vector<16x16xbf16>
    %cst_39 = arith.constant 1.000000e+00 : bf16
    %74 = vector.broadcast %cst_39 : bf16 to vector<16x16xbf16>
    %75 = arith.addf %73, %74 : vector<16x16xbf16>
    %76 = arith.mulf %70, %75 : vector<16x16xbf16>
    %c0_40 = arith.constant 0 : index
    %c0_41 = arith.constant 0 : index
    %77 = vector.load %arg12[%c0_40, %c0_41] : memref<16x8xbf16, #tpu.memory_space<vmem>>, vector<16x8xbf16>
    %cst_42 = arith.constant dense<0.000000e+00> : vector<16x8xf32>
    %78 = tpu.matmul %76, %77, %cst_42 {dimension_numbers = #tpu.dot_dimension_numbers<[1], [0], [0], [1], [0, 0, 1, 1], [], []>} : vector<16x16xbf16>, vector<16x8xbf16>, vector<16x8xf32> -> vector<16x8xf32>
    %c0_43 = arith.constant 0 : index
    %c0_44 = arith.constant 0 : index
    %79 = vector.load %arg13[%c0_43, %c0_44] : memref<1x8xf32, #tpu.memory_space<vmem>>, vector<1x8xf32>
    %80 = vector.broadcast %79 : vector<1x8xf32> to vector<16x8xf32>
    %81 = arith.addf %78, %80 : vector<16x8xf32>
    %c0_45 = arith.constant 0 : index
    %c0_46 = arith.constant 0 : index
    %82 = vector.load %arg14[%c0_45, %c0_46] : memref<16x8xf32, #tpu.memory_space<vmem>>, vector<16x8xf32>
    tpu.vector_store %arg14[%c0_45, %c0_46], %81 {strides = array<i32>} : memref<16x8xf32, #tpu.memory_space<vmem>>, vector<16x8xf32>,
    return
  }
  func.func @transform_0(%arg0: i32) -> (i32, i32) {
    %c0_i32 = arith.constant 0 : i32
    %c0_i32_0 = arith.constant 0 : i32
    return %arg0, %c0_i32 : i32, i32
  }
  func.func @transform_1(%arg0: i32) -> (i32, i32) {
    %c0_i32 = arith.constant 0 : i32
    %c0_i32_0 = arith.constant 0 : i32
    %c0_i32_1 = arith.constant 0 : i32
    return %c0_i32, %c0_i32_0 : i32, i32
  }
  func.func @transform_2(%arg0: i32) -> (i32, i32) {
    %c0_i32 = arith.constant 0 : i32
    %c0_i32_0 = arith.constant 0 : i32
    %c0_i32_1 = arith.constant 0 : i32
    return %c0_i32, %c0_i32_0 : i32, i32
  }
  func.func @transform_3(%arg0: i32) -> (i32, i32) {
    %c0_i32 = arith.constant 0 : i32
    %c0_i32_0 = arith.constant 0 : i32
    %c0_i32_1 = arith.constant 0 : i32
    return %c0_i32, %c0_i32_0 : i32, i32
  }
  func.func @transform_4(%arg0: i32) -> (i32, i32) {
    %c0_i32 = arith.constant 0 : i32
    %c0_i32_0 = arith.constant 0 : i32
    %c0_i32_1 = arith.constant 0 : i32
    return %c0_i32, %c0_i32_0 : i32, i32
  }
  func.func @transform_5(%arg0: i32) -> (i32, i32) {
    %c0_i32 = arith.constant 0 : i32
    %c0_i32_0 = arith.constant 0 : i32
    %c0_i32_1 = arith.constant 0 : i32
    return %c0_i32, %c0_i32_0 : i32, i32
  }
  func.func @transform_6(%arg0: i32) -> (i32, i32) {
    %c0_i32 = arith.constant 0 : i32
    %c0_i32_0 = arith.constant 0 : i32
    %c0_i32_1 = arith.constant 0 : i32
    return %c0_i32, %c0_i32_0 : i32, i32
  }
  func.func @transform_7(%arg0: i32) -> (i32, i32) {
    %c0_i32 = arith.constant 0 : i32
    %c0_i32_0 = arith.constant 0 : i32
    %c0_i32_1 = arith.constant 0 : i32
    return %c0_i32, %c0_i32_0 : i32, i32
  }
  func.func @transform_8(%arg0: i32) -> (i32, i32) {
    %c0_i32 = arith.constant 0 : i32
    %c0_i32_0 = arith.constant 0 : i32
    %c0_i32_1 = arith.constant 0 : i32
    return %c0_i32, %c0_i32_0 : i32, i32
  }
  func.func @transform_9(%arg0: i32) -> (i32, i32) {
    %c0_i32 = arith.constant 0 : i32
    %c0_i32_0 = arith.constant 0 : i32
    %c0_i32_1 = arith.constant 0 : i32
    return %c0_i32, %c0_i32_0 : i32, i32
  }
  func.func @transform_10(%arg0: i32) -> (i32, i32) {
    %c0_i32 = arith.constant 0 : i32
    %c0_i32_0 = arith.constant 0 : i32
    %c0_i32_1 = arith.constant 0 : i32
    return %c0_i32, %c0_i32_0 : i32, i32
  }
  func.func @transform_11(%arg0: i32) -> (i32, i32) {
    %c0_i32 = arith.constant 0 : i32
    %c0_i32_0 = arith.constant 0 : i32
    %c0_i32_1 = arith.constant 0 : i32
    return %c0_i32, %c0_i32_0 : i32, i32
  }
  func.func @transform_12(%arg0: i32) -> (i32, i32) {
    %c0_i32 = arith.constant 0 : i32
    %c0_i32_0 = arith.constant 0 : i32
    %c0_i32_1 = arith.constant 0 : i32
    return %c0_i32, %c0_i32_0 : i32, i32
  }
  func.func @transform_13(%arg0: i32) -> (i32, i32) {
    %c0_i32 = arith.constant 0 : i32
    %c0_i32_0 = arith.constant 0 : i32
    return %arg0, %c0_i32 : i32, i32
  }
}

</mosaic_0001>

<llo_original>
// kernel: dann_forward.1
$region0: #{dann_forward.1}
  #allocation0 [shape = 'u32[]', space=smem, size = 0x4, offset = 0x4, fixed_abs, tag = 'smem constant byte address 0x4 - core index']
  #allocation1 [shape = 'u32[144,128]{1,0:T(1,128)}', space=vmem, size = 0x12000, scoped, tag = 'internal scratch']
  %s0 = inlined_call_operand.vmem [shape: f32[8,32], index: 0, kind: input, shape index: {}]
  %s1 = inlined_call_operand.vmem [shape: bf16[32,128], index: 1, kind: input, shape index: {}]
  %s2 = inlined_call_operand.vmem [shape: f32[1,128], index: 2, kind: input, shape index: {}]
  %s3 = inlined_call_operand.vmem [shape: bf16[128,64], index: 3, kind: input, shape index: {}]
  %s4 = inlined_call_operand.vmem [shape: f32[1,64], index: 4, kind: input, shape index: {}]
  %s5 = inlined_call_operand.vmem [shape: bf16[64,32], index: 5, kind: input, shape index: {}]
  %s6 = inlined_call_operand.vmem [shape: f32[1,32], index: 6, kind: input, shape index: {}]
  %s7 = inlined_call_operand.vmem [shape: bf16[32,32], index: 7, kind: input, shape index: {}]
  %s8 = inlined_call_operand.vmem [shape: f32[1,32], index: 8, kind: input, shape index: {}]
  %s9 = inlined_call_operand.vmem [shape: bf16[32,16], index: 9, kind: input, shape index: {}]
  %s10 = inlined_call_operand.vmem [shape: f32[1,16], index: 10, kind: input, shape index: {}]
  %s11 = inlined_call_operand.vmem [shape: bf16[16,8], index: 11, kind: input, shape index: {}]
  %s12 = inlined_call_operand.vmem [shape: f32[1,8], index: 12, kind: input, shape index: {}]
  %s13 = inlined_call_operand.vmem [shape: f32[8,8], index: 13, kind: output, shape index: {}]
  %s14 = sld [smem:[#allocation0]]
  $region96: #{dann_forward.1} parent=0
    _
  %s16 = ssub.s32 1, %s14
  %s17 = scalar_select 0, %s16, %s14
  $region1: #{dann_forward.1} parent=0
    #allocation2 [shape = 'u8[8192]{0}', space=vmem, size = 0x2000, scoped, tag = 'output window, operand 0, single buffered']
    // Predicated region
    $region2: #{dann_forward.1} parent=1 // pred_check
      _
    $region3: #{dann_forward.1} parent=1 // pred_check_branch
      %19 = sbr.rel (0) target = $region5
    $region4: #{dann_forward.1} parent=1 // pred_region
      _
    $region5: #{dann_forward.1} parent=1 // pred_fallthru
      _
    // Predicated region
    $region6: #{dann_forward.1} parent=1 // pred_check
      _
    $region7: #{dann_forward.1} parent=1 // pred_check_branch
      %21 = sbr.rel (0) target = $region9
    $region8: #{dann_forward.1} parent=1 // pred_region
      _
    $region9: #{dann_forward.1} parent=1 // pred_fallthru
      _
    // Predicated region
    $region10: #{dann_forward.1} parent=1 // pred_check
      _
    $region11: #{dann_forward.1} parent=1 // pred_check_branch
      %23 = sbr.rel (0) target = $region13
    $region12: #{dann_forward.1} parent=1 // pred_region
      _
    $region13: #{dann_forward.1} parent=1 // pred_fallthru
      _
    // Predicated region
    $region14: #{dann_forward.1} parent=1 // pred_check
      _
    $region15: #{dann_forward.1} parent=1 // pred_check_branch
      %25 = sbr.rel (0) target = $region17
    $region16: #{dann_forward.1} parent=1 // pred_region
      _
    $region17: #{dann_forward.1} parent=1 // pred_fallthru
      _
    // Predicated region
    $region18: #{dann_forward.1} parent=1 // pred_check
      _
    $region19: #{dann_forward.1} parent=1 // pred_check_branch
      %27 = sbr.rel (0) target = $region21
    $region20: #{dann_forward.1} parent=1 // pred_region
      _
    $region21: #{dann_forward.1} parent=1 // pred_fallthru
      _
    // Predicated region
    $region22: #{dann_forward.1} parent=1 // pred_check
      _
    $region23: #{dann_forward.1} parent=1 // pred_check_branch
      %29 = sbr.rel (0) target = $region25
    $region24: #{dann_forward.1} parent=1 // pred_region
      _
    $region25: #{dann_forward.1} parent=1 // pred_fallthru
      _
    // Predicated region
    $region26: #{dann_forward.1} parent=1 // pred_check
      _
    $region27: #{dann_forward.1} parent=1 // pred_check_branch
      %31 = sbr.rel (0) target = $region29
    $region28: #{dann_forward.1} parent=1 // pred_region
      _
    $region29: #{dann_forward.1} parent=1 // pred_fallthru
      _
    // Predicated region
    $region30: #{dann_forward.1} parent=1 // pred_check
      _
    $region31: #{dann_forward.1} parent=1 // pred_check_branch
      %33 = sbr.rel (0) target = $region33
    $region32: #{dann_forward.1} parent=1 // pred_region
      _
    $region33: #{dann_forward.1} parent=1 // pred_fallthru
      _
    // Predicated region
    $region34: #{dann_forward.1} parent=1 // pred_check
      _
    $region35: #{dann_forward.1} parent=1 // pred_check_branch
      %35 = sbr.rel (0) target = $region37
    $region36: #{dann_forward.1} parent=1 // pred_region
      _
    $region37: #{dann_forward.1} parent=1 // pred_fallthru
      _
    // Predicated region
    $region38: #{dann_forward.1} parent=1 // pred_check
      _
    $region39: #{dann_forward.1} parent=1 // pred_check_branch
      %37 = sbr.rel (0) target = $region41
    $region40: #{dann_forward.1} parent=1 // pred_region
      _
    $region41: #{dann_forward.1} parent=1 // pred_fallthru
      _
    // Predicated region
    $region42: #{dann_forward.1} parent=1 // pred_check
      _
    $region43: #{dann_forward.1} parent=1 // pred_check_branch
      %39 = sbr.rel (0) target = $region45
    $region44: #{dann_forward.1} parent=1 // pred_region
      _
    $region45: #{dann_forward.1} parent=1 // pred_fallthru
      _
    // Predicated region
    $region46: #{dann_forward.1} parent=1 // pred_check
      _
    $region47: #{dann_forward.1} parent=1 // pred_check_branch
      %41 = sbr.rel (0) target = $region49
    $region48: #{dann_forward.1} parent=1 // pred_region
      _
    $region49: #{dann_forward.1} parent=1 // pred_fallthru
      _
    // Predicated region
    $region50: #{dann_forward.1} parent=1 // pred_check
      _
    $region51: #{dann_forward.1} parent=1 // pred_check_branch
      %43 = sbr.rel (0) target = $region53
    $region52: #{dann_forward.1} parent=1 // pred_region
      _
    $region53: #{dann_forward.1} parent=1 // pred_fallthru
      _
    %v47 = vld [vmem:[%s0] sm:$0xff]
    %v48 = vld [vmem:[%s0 + $0x8] sm:$0xff]
    %v49 = vpack.c.bf16 %v48, %v47
    %v50 = vld [vmem:[%s1] sm:$0xf]
    %v51 = vld [vmem:[%s1 + $0x4] sm:$0xf]
    %v52 = vld [vmem:[%s1 + $0x8] sm:$0xf]
    %v53 = vld [vmem:[%s1 + $0xc] sm:$0xf]
    %v58 = vunpack.c.l.b16 %v50
    %v59 = vunpack.c.l.b16 %v51
    %v60 = vunpack.c.l.b16 %v52
    %v61 = vunpack.c.l.b16 %v53
    %v62 = vpack.c.b16 %v59, %v58
    %v63 = vpack.c.b16 %v61, %v60
    %vm66 = vcmask 261120
    %v68 = vsel %vm66, %v49, 0
    %70 = vmatprep.subr.bf16.mxu0 0
    %71 = vmatpush1.bf16.msra.mxu0 %v62
    %72 = vmatprep.subr.bf16.mxu0 0
    %73 = vmatpush1.bf16.msra.mxu0 %v63
    %74 = vmatprep.subr.bf16.mxu0 0
    %75 = vmatpush1.bf16.msra.mxu0 0
    %76 = vmatprep.subr.bf16.mxu0 0
    %77 = vmatpush1.bf16.msra.mxu0 0
    %78 = vmatprep.subr.bf16.mxu0 0
    %79 = vmatpush1.bf16.msra.mxu0 0
    %80 = vmatprep.subr.bf16.mxu0 0
    %81 = vmatpush1.bf16.msra.mxu0 0
    %82 = vmatprep.subr.bf16.mxu0 0
    %83 = vmatpush1.bf16.msra.mxu0 0
    %84 = vmatprep.subr.bf16.mxu0 0
    %85 = vmatpush1.bf16.msra.mxu0 0
    %86 = vmatprep.subr.bf16.mxu0 0
    %87 = vmatpush1.bf16.msra.mxu0 0
    %88 = vmatprep.subr.bf16.mxu0 0
    %89 = vmatpush1.bf16.msra.mxu0 0
    %90 = vmatprep.subr.bf16.mxu0 0
    %91 = vmatpush1.bf16.msra.mxu0 0
    %92 = vmatprep.subr.bf16.mxu0 0
    %93 = vmatpush1.bf16.msra.mxu0 0
    %94 = vmatprep.subr.bf16.mxu0 0
    %95 = vmatpush1.bf16.msra.mxu0 0
    %96 = vmatprep.subr.bf16.mxu0 0
    %97 = vmatpush1.bf16.msra.mxu0 0
    %98 = vmatprep.subr.bf16.mxu0 0
    %99 = vmatpush1.bf16.msra.mxu0 0
    %100 = vmatprep.subr.bf16.mxu0 0
    %101 = vmatpush1.bf16.msra.mxu0 0
    %102 = vmatprep.mubr.bf16.mxu0 0
    %103 = vmatmul.mubr.bf16.gmra.mrb[0].mxu0 %v68
    %v104 = vpop.f32.mrb[0].mxu0
    %v105 = vadd.f32 0.0, %v104
    %v106 = vpop.f32.mrb[0].mxu0
    %v107 = vpop.f32.mrb[0].mxu0
    %v108 = vadd.f32 0.0, %v107
    %v109 = vpop.f32.mrb[0].mxu0
    %110 = vdwg.mxu0
    %v111 = vpack.c.bf16 %v108, %v105
    %v112 = vld [vmem:[%s2] sm:$0x1]
    %v113 = vpack.c.bf16 %v112, %v112
    %v115 = vpack.i.b16 %v113, %v113
    %v117 = vlaneseq
    %v118 = vshrl.u32 %v117, 7
    %v119 = vsub.s32 0, %v118
    %v120 = vrot.slane %v115, %v119
    %v121 = vadd.bf16 %v111, %v120
    %v122 = vmul.bf16 %v121, 1056980736
    %v123 = vtanh.bf16.pop %v122
    %v124 = vadd.bf16 %v123, 1065369472
    %v125 = vmul.bf16 %v122, %v124
    %v126 = vld [vmem:[%s3] sm:$0xf]
    %v127 = vld [vmem:[%s3 + $0x4] sm:$0xf]
    %v128 = vld [vmem:[%s3 + $0x8] sm:$0xf]
    %v129 = vld [vmem:[%s3 + $0xc] sm:$0xf]
    %v130 = vld [vmem:[%s3 + $0x10] sm:$0xf]
    %v131 = vld [vmem:[%s3 + $0x14] sm:$0xf]
    %v132 = vld [vmem:[%s3 + $0x18] sm:$0xf]
    %v133 = vld [vmem:[%s3 + $0x1c] sm:$0xf]
    %v134 = vld [vmem:[%s3 + $0x20] sm:$0xf]
    %v135 = vld [vmem:[%s3 + $0x24] sm:$0xf]
    %v136 = vld [vmem:[%s3 + $0x28] sm:$0xf]
    %v137 = vld [vmem:[%s3 + $0x2c] sm:$0xf]
    %v138 = vld [vmem:[%s3 + $0x30] sm:$0xf]
    %v139 = vld [vmem:[%s3 + $0x34] sm:$0xf]
    %v140 = vld [vmem:[%s3 + $0x38] sm:$0xf]
    %v141 = vld [vmem:[%s3 + $0x3c] sm:$0xf]
    %v158 = vunpack.c.l.b16 %v126
    %v159 = vunpack.c.l.b16 %v127
    %v160 = vunpack.c.l.b16 %v128
    %v161 = vunpack.c.l.b16 %v129
    %v162 = vunpack.c.l.b16 %v130
    %v163 = vunpack.c.l.b16 %v131
    %v164 = vunpack.c.l.b16 %v132
    %v165 = vunpack.c.l.b16 %v133
    %v166 = vunpack.c.l.b16 %v134
    %v167 = vunpack.c.l.b16 %v135
    %v168 = vunpack.c.l.b16 %v136
    %v169 = vunpack.c.l.b16 %v137
    %v170 = vunpack.c.l.b16 %v138
    %v171 = vunpack.c.l.b16 %v139
    %v172 = vunpack.c.l.b16 %v140
    %v173 = vunpack.c.l.b16 %v141
    %v174 = vpack.c.b16 %v159, %v158
    %v175 = vpack.c.b16 %v161, %v160
    %v176 = vpack.c.b16 %v163, %v162
    %v177 = vpack.c.b16 %v165, %v164
    %v178 = vpack.c.b16 %v167, %v166
    %v179 = vpack.c.b16 %v169, %v168
    %v180 = vpack.c.b16 %v171, %v170
    %v181 = vpack.c.b16 %v173, %v172
    %190 = vmatprep.subr.bf16.mxu0 0
    %191 = vmatpush1.bf16.msra.mxu0 %v174
    %192 = vmatprep.subr.bf16.mxu0 0
    %193 = vmatpush1.bf16.msra.mxu0 %v175
    %194 = vmatprep.subr.bf16.mxu0 0
    %195 = vmatpush1.bf16.msra.mxu0 %v176
    %196 = vmatprep.subr.bf16.mxu0 0
    %197 = vmatpush1.bf16.msra.mxu0 %v177
    %198 = vmatprep.subr.bf16.mxu0 0
    %199 = vmatpush1.bf16.msra.mxu0 %v178
    %200 = vmatprep.subr.bf16.mxu0 0
    %201 = vmatpush1.bf16.msra.mxu0 %v179
    %202 = vmatprep.subr.bf16.mxu0 0
    %203 = vmatpush1.bf16.msra.mxu0 %v180
    %204 = vmatprep.subr.bf16.mxu0 0
    %205 = vmatpush1.bf16.msra.mxu0 %v181
    %206 = vmatprep.subr.bf16.mxu0 0
    %207 = vmatpush1.bf16.msra.mxu0 0
    %208 = vmatprep.subr.bf16.mxu0 0
    %209 = vmatpush1.bf16.msra.mxu0 0
    %210 = vmatprep.subr.bf16.mxu0 0
    %211 = vmatpush1.bf16.msra.mxu0 0
    %212 = vmatprep.subr.bf16.mxu0 0
    %213 = vmatpush1.bf16.msra.mxu0 0
    %214 = vmatprep.subr.bf16.mxu0 0
    %215 = vmatpush1.bf16.msra.mxu0 0
    %216 = vmatprep.subr.bf16.mxu0 0
    %217 = vmatpush1.bf16.msra.mxu0 0
    %218 = vmatprep.subr.bf16.mxu0 0
    %219 = vmatpush1.bf16.msra.mxu0 0
    %220 = vmatprep.subr.bf16.mxu0 0
    %221 = vmatpush1.bf16.msra.mxu0 0
    %222 = vmatprep.mubr.bf16.mxu0 0
    %223 = vmatmul.mubr.bf16.gmra.mrb[0].mxu0 %v125
    %v224 = vpop.f32.mrb[0].mxu0
    %v225 = vadd.f32 0.0, %v224
    %v226 = vpop.f32.mrb[0].mxu0
    %v227 = vpop.f32.mrb[0].mxu0
    %v228 = vadd.f32 0.0, %v227
    %v229 = vpop.f32.mrb[0].mxu0
    %230 = vdwg.mxu0
    %v231 = vpack.c.bf16 %v228, %v225
    %v232 = vld [vmem:[%s4] sm:$0x1]
    %v233 = vpack.c.bf16 %v232, %v232
    %v235 = vpack.i.b16 %v233, %v233
    %v237 = vlaneseq
    %v238 = vshrl.u32 %v237, 7
    %v239 = vsub.s32 0, %v238
    %v240 = vrot.slane %v235, %v239
    %v241 = vadd.bf16 %v231, %v240
    %v242 = vmul.bf16 %v241, 1056980736
    %v243 = vtanh.bf16.pop %v242
    %v244 = vadd.bf16 %v243, 1065369472
    %v245 = vmul.bf16 %v242, %v244
    %v246 = vld [vmem:[%s5] sm:$0xf]
    %v247 = vld [vmem:[%s5 + $0x4] sm:$0xf]
    %v248 = vld [vmem:[%s5 + $0x8] sm:$0xf]
    %v249 = vld [vmem:[%s5 + $0xc] sm:$0xf]
    %v250 = vld [vmem:[%s5 + $0x10] sm:$0xf]
    %v251 = vld [vmem:[%s5 + $0x14] sm:$0xf]
    %v252 = vld [vmem:[%s5 + $0x18] sm:$0xf]
    %v253 = vld [vmem:[%s5 + $0x1c] sm:$0xf]
    %v262 = vunpack.c.l.b16 %v246
    %v263 = vunpack.c.l.b16 %v247
    %v264 = vunpack.c.l.b16 %v248
    %v265 = vunpack.c.l.b16 %v249
    %v266 = vunpack.c.l.b16 %v250
    %v267 = vunpack.c.l.b16 %v251
    %v268 = vunpack.c.l.b16 %v252
    %v269 = vunpack.c.l.b16 %v253
    %v270 = vpack.c.b16 %v263, %v262
    %v271 = vpack.c.b16 %v265, %v264
    %v272 = vpack.c.b16 %v267, %v266
    %v273 = vpack.c.b16 %v269, %v268
    %vm278 = vcmask 523264
    %v280 = vsel %vm278, %v245, 0
    %282 = vmatprep.subr.bf16.mxu0 0
    %283 = vmatpush1.bf16.msra.mxu0 %v270
    %284 = vmatprep.subr.bf16.mxu0 0
    %285 = vmatpush1.bf16.msra.mxu0 %v271
    %286 = vmatprep.subr.bf16.mxu0 0
    %287 = vmatpush1.bf16.msra.mxu0 %v272
    %288 = vmatprep.subr.bf16.mxu0 0
    %289 = vmatpush1.bf16.msra.mxu0 %v273
    %290 = vmatprep.subr.bf16.mxu0 0
    %291 = vmatpush1.bf16.msra.mxu0 0
    %292 = vmatprep.subr.bf16.mxu0 0
    %293 = vmatpush1.bf16.msra.mxu0 0
    %294 = vmatprep.subr.bf16.mxu0 0
    %295 = vmatpush1.bf16.msra.mxu0 0
    %296 = vmatprep.subr.bf16.mxu0 0
    %297 = vmatpush1.bf16.msra.mxu0 0
    %298 = vmatprep.subr.bf16.mxu0 0
    %299 = vmatpush1.bf16.msra.mxu0 0
    %300 = vmatprep.subr.bf16.mxu0 0
    %301 = vmatpush1.bf16.msra.mxu0 0
    %302 = vmatprep.subr.bf16.mxu0 0
    %303 = vmatpush1.bf16.msra.mxu0 0
    %304 = vmatprep.subr.bf16.mxu0 0
    %305 = vmatpush1.bf16.msra.mxu0 0
    %306 = vmatprep.subr.bf16.mxu0 0
    %307 = vmatpush1.bf16.msra.mxu0 0
    %308 = vmatprep.subr.bf16.mxu0 0
    %309 = vmatpush1.bf16.msra.mxu0 0
    %310 = vmatprep.subr.bf16.mxu0 0
    %311 = vmatpush1.bf16.msra.mxu0 0
    %312 = vmatprep.subr.bf16.mxu0 0
    %313 = vmatpush1.bf16.msra.mxu0 0
    %314 = vmatprep.mubr.bf16.mxu0 0
    %315 = vmatmul.mubr.bf16.gmra.mrb[0].mxu0 %v280
    %v316 = vpop.f32.mrb[0].mxu0
    %v317 = vadd.f32 0.0, %v316
    %v318 = vpop.f32.mrb[0].mxu0
    %v319 = vpop.f32.mrb[0].mxu0
    %v320 = vadd.f32 0.0, %v319
    %v321 = vpop.f32.mrb[0].mxu0
    %322 = vdwg.mxu0
    %v323 = vpack.c.bf16 %v320, %v317
    %v324 = vld [vmem:[%s6] sm:$0x1]
    %v325 = vpack.c.bf16 %v324, %v324
    %v327 = vpack.i.b16 %v325, %v325
    %v329 = vlaneseq
    %v330 = vshrl.u32 %v329, 7
    %v331 = vsub.s32 0, %v330
    %v332 = vrot.slane %v327, %v331
    %v333 = vadd.bf16 %v323, %v332
    %v334 = vmul.bf16 %v333, 1056980736
    %v335 = vtanh.bf16.pop %v334
    %v336 = vadd.bf16 %v335, 1065369472
    %v337 = vmul.bf16 %v334, %v336
    %v338 = vld [vmem:[%s7] sm:$0xf]
    %v339 = vld [vmem:[%s7 + $0x4] sm:$0xf]
    %v340 = vld [vmem:[%s7 + $0x8] sm:$0xf]
    %v341 = vld [vmem:[%s7 + $0xc] sm:$0xf]
    %v346 = vunpack.c.l.b16 %v338
    %v347 = vunpack.c.l.b16 %v339
    %v348 = vunpack.c.l.b16 %v340
    %v349 = vunpack.c.l.b16 %v341
    %v350 = vpack.c.b16 %v347, %v346
    %v351 = vpack.c.b16 %v349, %v348
    %v355 = vsel %vm66, %v337, 0
    %357 = vmatprep.subr.bf16.mxu0 0
    %358 = vmatpush1.bf16.msra.mxu0 %v350
    %359 = vmatprep.subr.bf16.mxu0 0
    %360 = vmatpush1.bf16.msra.mxu0 %v351
    %361 = vmatprep.subr.bf16.mxu0 0
    %362 = vmatpush1.bf16.msra.mxu0 0
    %363 = vmatprep.subr.bf16.mxu0 0
    %364 = vmatpush1.bf16.msra.mxu0 0
    %365 = vmatprep.subr.bf16.mxu0 0
    %366 = vmatpush1.bf16.msra.mxu0 0
    %367 = vmatprep.subr.bf16.mxu0 0
    %368 = vmatpush1.bf16.msra.mxu0 0
    %369 = vmatprep.subr.bf16.mxu0 0
    %370 = vmatpush1.bf16.msra.mxu0 0
    %371 = vmatprep.subr.bf16.mxu0 0
    %372 = vmatpush1.bf16.msra.mxu0 0
    %373 = vmatprep.subr.bf16.mxu0 0
    %374 = vmatpush1.bf16.msra.mxu0 0
    %375 = vmatprep.subr.bf16.mxu0 0
    %376 = vmatpush1.bf16.msra.mxu0 0
    %377 = vmatprep.subr.bf16.mxu0 0
    %378 = vmatpush1.bf16.msra.mxu0 0
    %379 = vmatprep.subr.bf16.mxu0 0
    %380 = vmatpush1.bf16.msra.mxu0 0
    %381 = vmatprep.subr.bf16.mxu0 0
    %382 = vmatpush1.bf16.msra.mxu0 0
    %383 = vmatprep.subr.bf16.mxu0 0
    %384 = vmatpush1.bf16.msra.mxu0 0
    %385 = vmatprep.subr.bf16.mxu0 0
    %386 = vmatpush1.bf16.msra.mxu0 0
    %387 = vmatprep.subr.bf16.mxu0 0
    %388 = vmatpush1.bf16.msra.mxu0 0
    %389 = vmatprep.mubr.bf16.mxu0 0
    %390 = vmatmul.mubr.bf16.gmra.mrb[0].mxu0 %v355
    %v391 = vpop.f32.mrb[0].mxu0
    %v392 = vadd.f32 0.0, %v391
    %v393 = vpop.f32.mrb[0].mxu0
    %v394 = vpop.f32.mrb[0].mxu0
    %v395 = vadd.f32 0.0, %v394
    %v396 = vpop.f32.mrb[0].mxu0
    %397 = vdwg.mxu0
    %v398 = vpack.c.bf16 %v395, %v392
    %v399 = vld [vmem:[%s8] sm:$0x1]
    %v400 = vpack.c.bf16 %v399, %v399
    %v402 = vpack.i.b16 %v400, %v400
    %v404 = vlaneseq
    %v405 = vshrl.u32 %v404, 7
    %v406 = vsub.s32 0, %v405
    %v407 = vrot.slane %v402, %v406
    %v408 = vadd.bf16 %v398, %v407
    %v409 = vmul.bf16 %v408, 1056980736
    %v410 = vtanh.bf16.pop %v409
    %v411 = vadd.bf16 %v410, 1065369472
    %v412 = vmul.bf16 %v409, %v411
    %v413 = vld [vmem:[%s9] sm:$0xf]
    %v414 = vld [vmem:[%s9 + $0x4] sm:$0xf]
    %v415 = vld [vmem:[%s9 + $0x8] sm:$0xf]
    %v416 = vld [vmem:[%s9 + $0xc] sm:$0xf]
    %v421 = vunpack.c.l.b16 %v413
    %v422 = vunpack.c.l.b16 %v414
    %v423 = vunpack.c.l.b16 %v415
    %v424 = vunpack.c.l.b16 %v416
    %v425 = vpack.c.b16 %v422, %v421
    %v426 = vpack.c.b16 %v424, %v423
    %v430 = vsel %vm66, %v412, 0
    %432 = vmatprep.subr.bf16.mxu0 0
    %433 = vmatpush1.bf16.msra.mxu0 %v425
    %434 = vmatprep.subr.bf16.mxu0 0
    %435 = vmatpush1.bf16.msra.mxu0 %v426
    %436 = vmatprep.subr.bf16.mxu0 0
    %437 = vmatpush1.bf16.msra.mxu0 0
    %438 = vmatprep.subr.bf16.mxu0 0
    %439 = vmatpush1.bf16.msra.mxu0 0
    %440 = vmatprep.subr.bf16.mxu0 0
    %441 = vmatpush1.bf16.msra.mxu0 0
    %442 = vmatprep.subr.bf16.mxu0 0
    %443 = vmatpush1.bf16.msra.mxu0 0
    %444 = vmatprep.subr.bf16.mxu0 0
    %445 = vmatpush1.bf16.msra.mxu0 0
    %446 = vmatprep.subr.bf16.mxu0 0
    %447 = vmatpush1.bf16.msra.mxu0 0
    %448 = vmatprep.subr.bf16.mxu0 0
    %449 = vmatpush1.bf16.msra.mxu0 0
    %450 = vmatprep.subr.bf16.mxu0 0
    %451 = vmatpush1.bf16.msra.mxu0 0
    %452 = vmatprep.subr.bf16.mxu0 0
    %453 = vmatpush1.bf16.msra.mxu0 0
    %454 = vmatprep.subr.bf16.mxu0 0
    %455 = vmatpush1.bf16.msra.mxu0 0
    %456 = vmatprep.subr.bf16.mxu0 0
    %457 = vmatpush1.bf16.msra.mxu0 0
    %458 = vmatprep.subr.bf16.mxu0 0
    %459 = vmatpush1.bf16.msra.mxu0 0
    %460 = vmatprep.subr.bf16.mxu0 0
    %461 = vmatpush1.bf16.msra.mxu0 0
    %462 = vmatprep.subr.bf16.mxu0 0
    %463 = vmatpush1.bf16.msra.mxu0 0
    %464 = vmatprep.mubr.bf16.mxu0 0
    %465 = vmatmul.mubr.bf16.gmra.mrb[0].mxu0 %v430
    %v466 = vpop.f32.mrb[0].mxu0
    %v467 = vadd.f32 0.0, %v466
    %v468 = vpop.f32.mrb[0].mxu0
    %v469 = vpop.f32.mrb[0].mxu0
    %v470 = vadd.f32 0.0, %v469
    %v471 = vpop.f32.mrb[0].mxu0
    %472 = vdwg.mxu0
    %v473 = vpack.c.bf16 %v470, %v467
    %v474 = vld [vmem:[%s10] sm:$0x1]
    %v475 = vpack.c.bf16 %v474, %v474
    %v477 = vpack.i.b16 %v475, %v475
    %v479 = vlaneseq
    %v480 = vshrl.u32 %v479, 7
    %v481 = vsub.s32 0, %v480
    %v482 = vrot.slane %v477, %v481
    %v483 = vadd.bf16 %v473, %v482
    %v484 = vmul.bf16 %v483, 1056980736
    %v485 = vtanh.bf16.pop %v484
    %v486 = vadd.bf16 %v485, 1065369472
    %v487 = vmul.bf16 %v484, %v486
    %v488 = vld [vmem:[%s11] sm:$0xf]
    %v489 = vld [vmem:[%s11 + $0x4] sm:$0xf]
    %v490 = vld [vmem:[%s12] sm:$0x1]
    %v492 = vlaneseq
    %v493 = vshrl.u32 %v492, 7
    %v494 = vsub.s32 0, %v493
    %v495 = vrot.slane %v490, %v494
    %v499 = vunpack.c.l.b16 %v488
    %v500 = vunpack.c.l.b16 %v489
    %v501 = vpack.c.b16 %v500, %v499
    %vm503 = vcmask 130048
    %v505 = vsel %vm503, %v487, 0
    %507 = vmatprep.subr.bf16.mxu0 0
    %508 = vmatpush1.bf16.msra.mxu0 %v501
    %509 = vmatprep.subr.bf16.mxu0 0
    %510 = vmatpush1.bf16.msra.mxu0 0
    %511 = vmatprep.subr.bf16.mxu0 0
    %512 = vmatpush1.bf16.msra.mxu0 0
    %513 = vmatprep.subr.bf16.mxu0 0
    %514 = vmatpush1.bf16.msra.mxu0 0
    %515 = vmatprep.subr.bf16.mxu0 0
    %516 = vmatpush1.bf16.msra.mxu0 0
    %517 = vmatprep.subr.bf16.mxu0 0
    %518 = vmatpush1.bf16.msra.mxu0 0
    %519 = vmatprep.subr.bf16.mxu0 0
    %520 = vmatpush1.bf16.msra.mxu0 0
    %521 = vmatprep.subr.bf16.mxu0 0
    %522 = vmatpush1.bf16.msra.mxu0 0
    %523 = vmatprep.subr.bf16.mxu0 0
    %524 = vmatpush1.bf16.msra.mxu0 0
    %525 = vmatprep.subr.bf16.mxu0 0
    %526 = vmatpush1.bf16.msra.mxu0 0
    %527 = vmatprep.subr.bf16.mxu0 0
    %528 = vmatpush1.bf16.msra.mxu0 0
    %529 = vmatprep.subr.bf16.mxu0 0
    %530 = vmatpush1.bf16.msra.mxu0 0
    %531 = vmatprep.subr.bf16.mxu0 0
    %532 = vmatpush1.bf16.msra.mxu0 0
    %533 = vmatprep.subr.bf16.mxu0 0
    %534 = vmatpush1.bf16.msra.mxu0 0
    %535 = vmatprep.subr.bf16.mxu0 0
    %536 = vmatpush1.bf16.msra.mxu0 0
    %537 = vmatprep.subr.bf16.mxu0 0
    %538 = vmatpush1.bf16.msra.mxu0 0
    %539 = vmatprep.mubr.bf16.mxu0 0
    %540 = vmatmul.mubr.bf16.gmra.mrb[0].mxu0 %v505
    %v541 = vpop.f32.mrb[0].mxu0
    %v542 = vadd.f32 %v495, %v541
    %v543 = vpop.f32.mrb[0].mxu0
    %v544 = vpop.f32.mrb[0].mxu0
    %v545 = vadd.f32 %v495, %v544
    %v546 = vpop.f32.mrb[0].mxu0
    %547 = vdwg.mxu0
    %vm548 = vcmask 64512
    %549 = vst.msk [vmem:[#allocation2] sm:$0xff] %vm548, %v542
    %550 = vst.msk [vmem:[#allocation2 + $0x8] sm:$0xff] %vm548, %v545
    // Predicated region
    $region54: #{dann_forward.1} parent=1 // pred_check
      _
    $region55: #{dann_forward.1} parent=1 // pred_check_branch
      %552 = sbr.rel (0) target = $region57
    $region56: #{dann_forward.1} parent=1 // pred_region
      // Predicated region
      $region58: #{dann_forward.1} parent=56 // pred_check
        _
      $region59: #{dann_forward.1} parent=56 // pred_check_branch
        %554 = sbr.rel (0) target = $region61
      $region60: #{dann_forward.1} parent=56 // pred_region
        // Predicated region
        $region62: #{dann_forward.1} parent=60 // pred_check
          _
        $region63: #{dann_forward.1} parent=60 // pred_check_branch
          %556 = sbr.rel (0) target = $region65
        $region64: #{dann_forward.1} parent=60 // pred_region
          // Predicated region
          $region77: #{dann_forward.1} parent=64 // pred_check
            _
          $region78: #{dann_forward.1} parent=64 // pred_check_branch
            %571 = sbr.rel (0) target = $region80
          $region79: #{dann_forward.1} parent=64 // pred_region
            loop: start=0, step=1, limit=1
            $region81: #{dann_forward.1} parent=79 // loop_pre_header
              _
            $region82: #{dann_forward.1} parent=79 // loop_header
              %s573 = sphi 0, %s577
              %p574 = scmp.ge.s32.totalorder %s573, 1
              %s578 = sphi [#allocation2], [#allocation2]
              %s579 = sphi %s13, %s13
            $region83: #{dann_forward.1} parent=79 // loop_header_branch
              %576 = sbr.rel (%p574) target = $region87
            $region84: #{dann_forward.1} parent=79 // loop_body
              %v580 = vld [vmem:[%s578] sm:$0xff]
              %581 = vst [vmem:[%s579] sm:$0xff] %v580
            $region85: #{dann_forward.1} parent=79 // loop_footer
              %s577 = sadd.s32 1, %s573
            $region86: #{dann_forward.1} parent=79 // loop_footer_branch
              %572 = sbr.rel target = $region82
            $region87: #{dann_forward.1} parent=79 // loop_exit
              _
          $region80: #{dann_forward.1} parent=64 // pred_fallthru
            _
          // Predicated region
          $region88: #{dann_forward.1} parent=64 // pred_check
            _
          $region89: #{dann_forward.1} parent=64 // pred_check_branch
            %583 = sbr.rel target = $region91
          $region90: #{dann_forward.1} parent=64 // pred_region
            _
          $region91: #{dann_forward.1} parent=64 // pred_fallthru
            _
        $region65: #{dann_forward.1} parent=60 // pred_fallthru
          _
        // Predicated region
        $region66: #{dann_forward.1} parent=60 // pred_check
          _
        $region67: #{dann_forward.1} parent=60 // pred_check_branch
          %558 = sbr.rel target = $region69
        $region68: #{dann_forward.1} parent=60 // pred_region
          loop: start=0, step=1, limit=1
          $region70: #{dann_forward.1} parent=68 // loop_pre_header
            _
          $region71: #{dann_forward.1} parent=68 // loop_header
            %s561 = sphi 0, %s565
            %p562 = scmp.ge.s32.totalorder %s561, 1
            %s566 = sphi [#allocation2], [#allocation2]
            %s567 = sphi %s13, %s13
          $region72: #{dann_forward.1} parent=68 // loop_header_branch
            %564 = sbr.rel (%p562) target = $region76
          $region73: #{dann_forward.1} parent=68 // loop_body
            %v568 = vld [vmem:[%s566] sm:$0xff]
            %569 = vst [vmem:[%s567] sm:$0xff] %v568
          $region74: #{dann_forward.1} parent=68 // loop_footer
            %s565 = sadd.s32 1, %s561
          $region75: #{dann_forward.1} parent=68 // loop_footer_branch
            %560 = sbr.rel target = $region71
          $region76: #{dann_forward.1} parent=68 // loop_exit
            _
        $region69: #{dann_forward.1} parent=60 // pred_fallthru
          _
      $region61: #{dann_forward.1} parent=56 // pred_fallthru
        _
      %584 = vnop
    $region57: #{dann_forward.1} parent=1 // pred_fallthru
      _
    // Predicated region
    $region92: #{dann_forward.1} parent=1 // pred_check
      _
    $region93: #{dann_forward.1} parent=1 // pred_check_branch
      %586 = sbr.rel (0) target = $region95
    $region94: #{dann_forward.1} parent=1 // pred_region
      _
    $region95: #{dann_forward.1} parent=1 // pred_fallthru
      _

</llo_original>
